<compile_context>
chip_gen: v7x
topology: tpu7x:2x2x1
jax: 0.10.0
libtpu: 0.0.40
codegen_flags: <defaults>
</compile_context>

<pallas_src>
import math
import functools

import jax
import jax.numpy as jnp
from jax.experimental import pallas as pl
from jax.experimental.pallas import tpu as pltpu


# --------------------------------------------------------------------------------------
# Kernel
# --------------------------------------------------------------------------------------
def _embed_kernel(x_ref, w_ref, pe_ref, o_ref):
    # x_ref:  (TL, 3*c_in)   pre-concatenated circular taps [x[t-1], x[t], x[t+1]]
    # w_ref:  (3*c_in, d_model)  fused conv weight (tap-major, channel-minor), resident
    # pe_ref: (TL, d_model)  positional-embedding tile (bf16 in HBM, upcast in the f32 add)
    # o_ref:  (TL, d_model)  output tile for (sequence tile t, batch b)
    acc = jnp.dot(x_ref[...], w_ref[...], preferred_element_type=jnp.float32)
    o_ref[...] = (acc + pe_ref[...].astype(jnp.float32)).astype(o_ref.dtype)


# --------------------------------------------------------------------------------------
# Parameter construction (done once, outside the per-call path)
# --------------------------------------------------------------------------------------
def make_positional_embedding(max_len, d_model):
    position = jnp.arange(max_len, dtype=jnp.float32)[:, None]            # (max_len, 1)
    div_term = jnp.exp(jnp.arange(0, d_model, 2, dtype=jnp.float32)
                       * (-(math.log(10000.0) / d_model)))                # (ceil(d/2),)
    pe = jnp.zeros((max_len, d_model), dtype=jnp.float32)
    sin_part = jnp.sin(position * div_term)
    cos_part = jnp.cos(position * div_term)
    pe = pe.at[:, 0::2].set(sin_part)
    if d_model % 2 == 0:
        pe = pe.at[:, 1::2].set(cos_part)
    else:
        pe = pe.at[:, 1::2].set(cos_part[:, :-1])
    return pe                                                             # (max_len, d_model)


def kaiming_normal_conv1d_weight(key, d_model, c_in, ksize=3):
    # PyTorch kaiming_normal_(mode='fan_in', nonlinearity='leaky_relu', a=0.01)
    fan_in = c_in * ksize
    gain = math.sqrt(2.0 / (1.0 + 0.01 ** 2))
    std = gain / math.sqrt(fan_in)
    return jax.random.normal(key, (d_model, c_in, ksize), dtype=jnp.float32) * std


def init_data_embedding_params(key, c_in, d_model, max_len=9000, pe_dtype=jnp.bfloat16):
    """Precompute kernel-ready parameters once (layout transforms hoisted off the call path)."""
    conv_w = kaiming_normal_conv1d_weight(key, d_model, c_in, 3)   # (d_model, c_in, 3), torch layout
    # K layout matches x_cat = [x[t-1], x[t], x[t+1]] (tap-major, channel-minor):
    #   w_cat[k*c_in + i, d] = conv_w[d, i, k]
    w_cat = jnp.transpose(conv_w, (2, 1, 0)).reshape(3 * c_in, d_model)   # (3*c_in, d_model)
    pe_f32 = make_positional_embedding(max_len, d_model)
    pe = pe_f32.astype(pe_dtype)                                          # bf16 table in HBM
    return {"conv_w": conv_w, "w_cat": w_cat, "pe": pe,
            "c_in": c_in, "d_model": d_model}


# --------------------------------------------------------------------------------------
# Wrapper
# --------------------------------------------------------------------------------------
def _lane_pad(n):
    return ((n + 127) // 128) * 128


def _pick_seq_tile(L, c_in, d_model, out_itemsize=4, pe_itemsize=2,
                   max_tile=2048, vmem_tile_budget=20 << 20):
    """Largest multiple-of-8 sequence tile whose double-buffered VMEM footprint fits the budget.

    Footprint accounts for lane padding of each block to 128 lanes. Never falls back to a
    whole-sequence tile: non-divisible L is padded up to a multiple of TL by the caller.
    """
    row_bytes = 2 * (_lane_pad(3 * c_in) * 4                     # x_cat tile (f32)
                     + _lane_pad(d_model) * pe_itemsize          # pe tile
                     + _lane_pad(d_model) * out_itemsize)        # out tile
    cap = min(max_tile, max(8, vmem_tile_budget // max(row_bytes, 1)))
    cap = max(8, (cap // 8) * 8)
    if L <= cap:
        return max(8, ((L + 7) // 8) * 8)
    # Prefer a divisor of L (no padding needed); otherwise use the cap and pad L.
    for tl in range(cap, 7, -8):
        if L % tl == 0:
            return tl
    return cap


@functools.partial(jax.jit, static_argnames=("out_dtype",))
def data_embedding(x, w_cat, pe, out_dtype=jnp.float32):
    """x: (B, L, c_in) f32; w_cat: (3*c_in, d_model) f32; pe: (max_len, d_model) (bf16 ok)."""
    B, L, c_in = x.shape
    d_model = w_cat.shape[1]
    out_itemsize = jnp.dtype(out_dtype).itemsize
    pe_itemsize = jnp.dtype(pe.dtype).itemsize

    TL = _pick_seq_tile(L, c_in, d_model, out_itemsize, pe_itemsize)
    nt = pl.cdiv(L, TL)
    L_pad = nt * TL

    # Pre-concatenate the circular taps in the wrapper: cheap (3*c_in << d_model bytes/row) and
    # removes all misaligned sublane slices / lane-concat temporaries from the kernel.
    x_cat = jnp.concatenate([jnp.roll(x, 1, axis=1), x, jnp.roll(x, -1, axis=1)],
                            axis=-1)                                       # (B, L, 3*c_in)
    pe_L = pe[:L]                                                          # (L, d_model)
    if L_pad != L:
        x_cat = jnp.pad(x_cat, ((0, 0), (0, L_pad - L), (0, 0)))
        pe_L = jnp.pad(pe_L, ((0, L_pad - L), (0, 0)))

    # VMEM estimate: double-buffered (x, pe, out) tiles + resident weight; cap at 40 MiB so it is
    # always safe on v7x's 64 MiB per-TC VMEM (and raises v5e's 16 MiB default scoped limit).
    tile_bytes = 2 * TL * (_lane_pad(3 * c_in) * 4
                           + _lane_pad(d_model) * pe_itemsize
                           + _lane_pad(d_model) * out_itemsize)
    w_bytes = 2 * ((3 * c_in + 7) // 8) * 8 * _lane_pad(d_model) * 4
    vmem_limit = int(min(max(2 * (tile_bytes + w_bytes), 32 << 20), 40 << 20))

    out = pl.pallas_call(
        _embed_kernel,
        out_shape=jax.ShapeDtypeStruct((B, L_pad, d_model), out_dtype),
        grid_spec=pltpu.PrefetchScalarGridSpec(
            num_scalar_prefetch=0,
            # Sequence tile outer, batch inner: PE block index (t, 0) is constant across the
            # inner axis, so the PE tile stays resident and streams from HBM exactly once.
            grid=(nt, B),
            in_specs=[
                pl.BlockSpec((None, TL, 3 * c_in), lambda t, b: (b, t, 0)),
                pl.BlockSpec((3 * c_in, d_model), lambda t, b: (0, 0)),
                pl.BlockSpec((TL, d_model), lambda t, b: (t, 0)),
            ],
            out_specs=pl.BlockSpec((None, TL, d_model), lambda t, b: (b, t, 0)),
        ),
        compiler_params=pltpu.CompilerParams(
            dimension_semantics=("parallel", "parallel"),
            vmem_limit_bytes=vmem_limit),
    )(x_cat, w_cat, pe_L)

    # Dropout(p=0) is the identity.  Slice off the L padding only when L was not tile-divisible.
    return out[:, :L] if L_pad != L else out


# --------------------------------------------------------------------------------------
# Pure-JAX reference
# --------------------------------------------------------------------------------------
def data_embedding_ref(x, conv_w, pe_L):
    # Circular conv1d (kernel 3, pad 1, no bias) + positional embedding.
    x_m1 = jnp.roll(x, 1, axis=1)
    x_p1 = jnp.roll(x, -1, axis=1)
    y = (jnp.einsum('blc,dc->bld', x_m1, conv_w[:, :, 0])
         + jnp.einsum('blc,dc->bld', x, conv_w[:, :, 1])
         + jnp.einsum('blc,dc->bld', x_p1, conv_w[:, :, 2]))
    return y + pe_L[None]


if __name__ == "__main__":
    B, L, c_in, d_model = 2, 8, 4, 32
    max_len = 9000

    key = jax.random.PRNGKey(0)
    kx, kw = jax.random.split(key)
    x = jax.random.normal(kx, (B, L, c_in), dtype=jnp.float32)
    params = init_data_embedding_params(kw, c_in, d_model, max_len)

    out = data_embedding(x, params["w_cat"], params["pe"])
    out = jax.block_until_ready(out)

    # Reference uses the same bf16-rounded PE table (kernel upcasts it in the f32 add).
    ref = data_embedding_ref(x, params["conv_w"], params["pe"][:L].astype(jnp.float32))
    assert out.shape == (B, L, d_model)
    assert jnp.allclose(out, ref, atol=1e-5, rtol=1e-5)

    print("KERNEL_OK")
</pallas_src>

<mosaic_0001>
module attributes {stable_mosaic.version = 11 : i64} {
  func.func @_embed_kernel(%arg0: i32, %arg1: i32, %arg2: memref<1x8x12xf32, #tpu.memory_space<vmem>>, %arg3: memref<12x32xf32, #tpu.memory_space<vmem>>, %arg4: memref<8x32xbf16, #tpu.memory_space<vmem>>, %arg5: memref<1x8x32xf32, #tpu.memory_space<vmem>>) attributes {dimension_semantics = [#tpu.dimension_semantics<parallel>, #tpu.dimension_semantics<parallel>], iteration_bounds = array<i64: 1, 2>, scalar_prefetch = 0 : i64, scratch_operands = 0 : i64, tpu.core_type = #tpu.core_type<tc>, window_params = [{transform_indices = @transform_0, window_bounds = array<i64: 1, 8, 12>}, {pipeline_mode = #tpu.pipeline_mode<synchronous>, transform_indices = @transform_1, window_bounds = array<i64: 12, 32>}, {transform_indices = @transform_2, window_bounds = array<i64: 8, 32>}, {transform_indices = @transform_3, window_bounds = array<i64: 1, 8, 32>}]} {
    %c0 = arith.constant 0 : index
    %c0_0 = arith.constant 0 : index
    %c0_1 = arith.constant 0 : index
    %0 = vector.load %arg2[%c0, %c0_0, %c0_1] : memref<1x8x12xf32, #tpu.memory_space<vmem>>, vector<1x8x12xf32>
    %1 = vector.shape_cast %0 : vector<1x8x12xf32> to vector<8x12xf32>
    %c0_2 = arith.constant 0 : index
    %c0_3 = arith.constant 0 : index
    %2 = vector.load %arg3[%c0_2, %c0_3] : memref<12x32xf32, #tpu.memory_space<vmem>>, vector<12x32xf32>
    %cst = arith.constant dense<0.000000e+00> : vector<8x32xf32>
    %3 = tpu.matmul %1, %2, %cst {dimension_numbers = #tpu.dot_dimension_numbers<[1], [0], [0], [1], [0, 0, 1, 1], [], []>} : vector<8x12xf32>, vector<12x32xf32>, vector<8x32xf32> -> vector<8x32xf32>
    %c0_4 = arith.constant 0 : index
    %c0_5 = arith.constant 0 : index
    %4 = vector.load %arg4[%c0_4, %c0_5] : memref<8x32xbf16, #tpu.memory_space<vmem>>, vector<8x32xbf16>
    %5 = arith.extf %4 : vector<8x32xbf16> to vector<8x32xf32>
    %6 = arith.addf %3, %5 : vector<8x32xf32>
    %c0_6 = arith.constant 0 : index
    %c0_7 = arith.constant 0 : index
    %c0_8 = arith.constant 0 : index
    %7 = vector.load %arg5[%c0_6, %c0_7, %c0_8] : memref<1x8x32xf32, #tpu.memory_space<vmem>>, vector<1x8x32xf32>
    %8 = vector.shape_cast %7 : vector<1x8x32xf32> to vector<8x32xf32>
    %9 = vector.shape_cast %6 : vector<8x32xf32> to vector<1x8x32xf32>
    tpu.vector_store %arg5[%c0_6, %c0_7, %c0_8], %9 {strides = array<i32>} : memref<1x8x32xf32, #tpu.memory_space<vmem>>, vector<1x8x32xf32>,
    return
  }
  func.func @transform_0(%arg0: i32, %arg1: i32) -> (i32, i32, i32) {
    %c0_i32 = arith.constant 0 : i32
    %c0_i32_0 = arith.constant 0 : i32
    return %arg1, %arg0, %c0_i32 : i32, i32, i32
  }
  func.func @transform_1(%arg0: i32, %arg1: i32) -> (i32, i32) {
    %c0_i32 = arith.constant 0 : i32
    %c0_i32_0 = arith.constant 0 : i32
    %c0_i32_1 = arith.constant 0 : i32
    return %c0_i32, %c0_i32_0 : i32, i32
  }
  func.func @transform_2(%arg0: i32, %arg1: i32) -> (i32, i32) {
    %c0_i32 = arith.constant 0 : i32
    %c0_i32_0 = arith.constant 0 : i32
    return %arg0, %c0_i32 : i32, i32
  }
  func.func @transform_3(%arg0: i32, %arg1: i32) -> (i32, i32, i32) {
    %c0_i32 = arith.constant 0 : i32
    %c0_i32_0 = arith.constant 0 : i32
    return %arg1, %arg0, %c0_i32 : i32, i32, i32
  }
}

</mosaic_0001>

<llo_original>
// kernel: data_embedding.1
$region0: #{data_embedding.1}
  #allocation0 [shape = 'u32[]', space=smem, size = 0x4, offset = 0x4, fixed_abs, tag = 'smem constant byte address 0x4 - core index']
  #allocation1 [shape = 'u32[144,128]{1,0:T(1,128)}', space=vmem, size = 0x12000, scoped, tag = 'internal scratch']
  %s0 = inlined_call_operand.vmem [shape: f32[2,8,12], index: 0, kind: input, shape index: {}]
  %s1 = inlined_call_operand.vmem [shape: f32[12,32], index: 1, kind: input, shape index: {}]
  %s2 = inlined_call_operand.vmem [shape: bf16[8,32], index: 2, kind: input, shape index: {}]
  %s3 = inlined_call_operand.hbm [shape: f32[2,8,32], index: 3, kind: output, shape index: {}]
  %s4 = sld [smem:[#allocation0]]
  $region45: #{data_embedding.1} parent=0
    _
  %s6 = ssub.s32 1, %s4
  %s7 = scalar_select 0, %s6, %s4
  $region1: #{data_embedding.1} parent=0
    #allocation2 [shape = 'u8[8192]{0}', space=vmem, size = 0x2000, scoped, tag = 'output window, operand 0']
    #allocation3 [shape = 's32[2]{0}', space=sflag, size = 0x8, scoped, tag = 'scoped memory for data_embedding.1']
    %8 = vsyncpa [#allocation3], 0
    %s9 = scalar_lea.sflag [#allocation3], 1
    %10 = vsyncpa %s9, 0
    loop: start=0, step=1, limit=4
    $region2: #{data_embedding.1} parent=1 // loop_pre_header
      _
    $region3: #{data_embedding.1} parent=1 // loop_header
      %s12 = sphi 0, %s16
      %p13 = scmp.ge.s32.totalorder %s12, 4
      %s19 = sphi 0, %s31
      %s20 = sphi 0, %s27
      %s21 = sphi 0, %s19
      %s22 = sphi 0, %s20
      %s23 = sphi 0, %s21
      %s24 = sphi 0, %s22
      %s36 = sphi 0, %s38
      %s39 = sphi 0, %s36
      %s40 = sphi 0, %s39
      %s56 = sphi 0, %s40
      %s60 = sphi 0, %s60
      %s62 = sphi 0, %s60
      %s63 = sphi 0, %s62
      %s77 = sphi 0, %s63
      %s83 = sphi 0, %s85
      %s86 = sphi 0, %s83
      %s87 = sphi 0, %s86
      %s103 = sphi 0, %s87
      %s111 = sphi 0, %s113
      %s114 = sphi 0, %s111
      %s115 = sphi 0, %s114
      %s131 = sphi 0, %s115
    $region4: #{data_embedding.1} parent=1 // loop_header_branch
      %15 = sbr.rel (%p13) target = $region8
    $region5: #{data_embedding.1} parent=1 // loop_body
      %s17 = ssub.s32 %s12, 1
      %s18 = ssub.s32 %s12, 2
      %s25 = sadd.s32 1, %s20
      %p26 = scmp.ge.s32.totalorder %s25, 2
      %s27 = scalar_select %p26, 0, %s25
      %s28 = sadd.s32 1, %s19
      %s29 = scalar_select %p26, %s28, %s19
      %p30 = scmp.ge.s32.totalorder %s29, 1
      %s31 = scalar_select %p30, 0, %s29
      %s32 = ssub.s32 %s20, %s27
      %s33 = ssub.s32 %s19, %s31
      %s34 = sor.u32 %s32, %s33
      %p35 = scmp.eq.s32.totalorder %s34, 0
      %s37 = sadd.s32 %s36, 1
      %s38 = scalar_select %p35, %s36, %s37
      %p41 = pneg %p35
      %p42 = scmp.eq.s32.totalorder %s12, 1
      %p43 = por %p41, %p42
      %p44 = scmp.ne.s32.totalorder %s36, %s39
      %p45 = scmp.eq.s32.totalorder %s12, 0
      %p46 = por %p44, %p45
      %p47 = scmp.ne.s32.totalorder %s36, %s39
      %p48 = scmp.eq.s32.totalorder %s17, 1
      %p49 = por %p47, %p48
      %p50 = scmp.ne.s32.totalorder %s39, %s40
      %p51 = scmp.eq.s32.totalorder %s17, 0
      %p52 = por %p50, %p51
      %p53 = scmp.ne.s32.totalorder %s39, %s40
      %p54 = scmp.eq.s32.totalorder %s18, 1
      %p55 = por %p53, %p54
      %p57 = scmp.ne.s32.totalorder %s40, %s56
      %p58 = scmp.eq.s32.totalorder %s18, 0
      %p59 = por %p57, %p58
      %s61 = sadd.s32 %s60, 1
      %p64 = scmp.eq.s32.totalorder %s12, 1
      %p65 = scmp.ne.s32.totalorder %s60, %s62
      %p66 = scmp.eq.s32.totalorder %s12, 0
      %p67 = por %p65, %p66
      %p68 = scmp.ne.s32.totalorder %s60, %s62
      %p69 = scmp.eq.s32.totalorder %s17, 1
      %p70 = por %p68, %p69
      %p71 = scmp.ne.s32.totalorder %s62, %s63
      %p72 = scmp.eq.s32.totalorder %s17, 0
      %p73 = por %p71, %p72
      %p74 = scmp.ne.s32.totalorder %s62, %s63
      %p75 = scmp.eq.s32.totalorder %s18, 1
      %p76 = por %p74, %p75
      %p78 = scmp.ne.s32.totalorder %s63, %s77
      %p79 = scmp.eq.s32.totalorder %s18, 0
      %p80 = por %p78, %p79
      %s81 = ssub.s32 %s19, %s31
      %p82 = scmp.eq.s32.totalorder %s81, 0
      %s84 = sadd.s32 %s83, 1
      %s85 = scalar_select %p82, %s83, %s84
      %p88 = pneg %p82
      %p89 = scmp.eq.s32.totalorder %s12, 1
      %p90 = por %p88, %p89
      %p91 = scmp.ne.s32.totalorder %s83, %s86
      %p92 = scmp.eq.s32.totalorder %s12, 0
      %p93 = por %p91, %p92
      %p94 = scmp.ne.s32.totalorder %s83, %s86
      %p95 = scmp.eq.s32.totalorder %s17, 1
      %p96 = por %p94, %p95
      %p97 = scmp.ne.s32.totalorder %s86, %s87
      %p98 = scmp.eq.s32.totalorder %s17, 0
      %p99 = por %p97, %p98
      %p100 = scmp.ne.s32.totalorder %s86, %s87
      %p101 = scmp.eq.s32.totalorder %s18, 1
      %p102 = por %p100, %p101
      %p104 = scmp.ne.s32.totalorder %s87, %s103
      %p105 = scmp.eq.s32.totalorder %s18, 0
      %p106 = por %p104, %p105
      %s107 = ssub.s32 %s20, %s27
      %s108 = ssub.s32 %s19, %s31
      %s109 = sor.u32 %s107, %s108
      %p110 = scmp.eq.s32.totalorder %s109, 0
      %s112 = sadd.s32 %s111, 1
      %s113 = scalar_select %p110, %s111, %s112
      %p116 = pneg %p110
      %p117 = scmp.eq.s32.totalorder %s12, 1
      %p118 = por %p116, %p117
      %p119 = scmp.ne.s32.totalorder %s111, %s114
      %p120 = scmp.eq.s32.totalorder %s12, 0
      %p121 = por %p119, %p120
      %p122 = scmp.ne.s32.totalorder %s111, %s114
      %p123 = scmp.eq.s32.totalorder %s17, 1
      %p124 = por %p122, %p123
      %p125 = scmp.ne.s32.totalorder %s114, %s115
      %p126 = scmp.eq.s32.totalorder %s17, 0
      %p127 = por %p125, %p126
      %p128 = scmp.ne.s32.totalorder %s114, %s115
      %p129 = scmp.eq.s32.totalorder %s18, 1
      %p130 = por %p128, %p129
      %p132 = scmp.ne.s32.totalorder %s115, %s131
      %p133 = scmp.eq.s32.totalorder %s18, 0
      %p134 = por %p132, %p133
      %p135 = scmp.le.s32.totalorder 1, %s12
      %p136 = scmp.lt.s32.totalorder %s12, 3
      %p137 = pnand %p135, %p136
      %p138 = pneg %p137
      // Predicated region
      $region9: #{data_embedding.1} parent=5 // pred_check
        _
      $region10: #{data_embedding.1} parent=5 // pred_check_branch
        %140 = sbr.rel (%p137) target = $region12
      $region11: #{data_embedding.1} parent=5 // pred_region
        %s141 = ssub.s32 %s12, 1
        // Predicated region
        $region13: #{data_embedding.1} parent=11 // pred_check
          %p142 = pneg %p73
        $region14: #{data_embedding.1} parent=11 // pred_check_branch
          %144 = sbr.rel (%p142) target = $region16
        $region15: #{data_embedding.1} parent=11 // pred_region
          _
        $region16: #{data_embedding.1} parent=11 // pred_fallthru
          _
        // Predicated region
        $region17: #{data_embedding.1} parent=11 // pred_check
          %p145 = pneg %p99
        $region18: #{data_embedding.1} parent=11 // pred_check_branch
          %147 = sbr.rel (%p145) target = $region20
        $region19: #{data_embedding.1} parent=11 // pred_region
          %p148 = scmp.lt.s32.totalorder %s21, 0
          %s149 = scalar_select %p148, %s21, 0
          %s150 = smul.addr %s149, 4
          %s151 = scalar_lea.vmem %s2, %s150
        $region20: #{data_embedding.1} parent=11 // pred_fallthru
          _
      $region12: #{data_embedding.1} parent=5 // pred_fallthru
        _
      %p152 = scmp.lt.s32.totalorder %s12, 2
      // Predicated region
      $region21: #{data_embedding.1} parent=5 // pred_check
        %p153 = pneg %p152
      $region22: #{data_embedding.1} parent=5 // pred_check_branch
        %155 = sbr.rel (%p153) target = $region24
      $region23: #{data_embedding.1} parent=5 // pred_region
        // Predicated region
        $region25: #{data_embedding.1} parent=23 // pred_check
          %p156 = pneg %p46
        $region26: #{data_embedding.1} parent=23 // pred_check_branch
          %158 = sbr.rel (%p156) target = $region28
        $region27: #{data_embedding.1} parent=23 // pred_region
          %p159 = scmp.lt.s32.totalorder %s20, 1
          %s160 = scalar_select %p159, %s20, 1
          %p161 = scmp.lt.s32.totalorder %s19, 0
          %s162 = scalar_select %p161, %s19, 0
          %s163 = sadd.s32 %s162, %s160
          %s164 = smul.addr %s163, 8
          %s165 = scalar_lea.vmem %s0, %s164
        $region28: #{data_embedding.1} parent=23 // pred_fallthru
          _
      $region24: #{data_embedding.1} parent=5 // pred_fallthru
        _
      %p166 = scmp.le.s32.totalorder 1, %s12
      %p167 = scmp.lt.s32.totalorder %s12, 3
      %p168 = pnand %p166, %p167
      %p169 = pneg %p168
      // Predicated region
      $region29: #{data_embedding.1} parent=5 // pred_check
        _
      $region30: #{data_embedding.1} parent=5 // pred_check_branch
        %171 = sbr.rel (%p168) target = $region32
      $region31: #{data_embedding.1} parent=5 // pred_region
        %s172 = ssub.s32 %s12, 1
        %p173 = scmp.lt.s32.totalorder %s22, 1
        %s174 = scalar_select %p173, %s22, 1
        %p175 = scmp.lt.s32.totalorder %s21, 0
        %s176 = scalar_select %p175, %s21, 0
        %s177 = sadd.s32 %s176, %s174
        %s178 = smul.addr %s177, 8
        %s179 = scalar_lea.vmem %s0, %s178
        %p180 = pneg %p52
        %p181 = pneg %p49
        %p182 = pneg %p73
        %p183 = pneg %p70
        %p184 = scmp.lt.s32.totalorder %s21, 0
        %s185 = scalar_select %p184, %s21, 0
        %s186 = smul.addr %s185, 4
        %s187 = scalar_lea.vmem %s2, %s186
        %p188 = pneg %p99
        %p189 = pneg %p96
        %p190 = pneg %p127
        %p191 = pneg %p124
        %s192 = sand.u32 %s114, 1
        %s193 = scalar_lea.sflag [#allocation3], %s192
        %s194 = sand.u32 %s114, 1
        %s195 = smul.addr %s194, 8
        %s196 = scalar_lea.vmem [#allocation2], %s195
        %p197 = scmp.lt.s32.totalorder %s22, 1
        %s198 = scalar_select %p197, %s22, 1
        %p199 = scmp.lt.s32.totalorder %s21, 0
        %s200 = scalar_select %p199, %s21, 0
        %s201 = sadd.s32 %s200, %s198
        %s202 = smul.addr %s201, 8
        %s203 = scalar_lea.vmem %s0, %s202
        %p204 = scmp.lt.s32.totalorder %s21, 0
        %s205 = scalar_select %p204, %s21, 0
        %s206 = smul.addr %s205, 4
        %s207 = scalar_lea.vmem %s2, %s206
        %v208 = vld [vmem:[%s203] sm:$0xff]
        %v209 = vld [vmem:[%s1] sm:$0xff]
        %v210 = vld [vmem:[%s1 + $0x8] sm:$0xf]
        %v211 = vld [vmem:[%s207] sm:$0xf]
        %v212 = vunpack.c.l.bf16 %v211
        %vm213 = vcmask 97280
        %v215 = vsel %vm213, %v208, 0
        %vm217 = vcmask 1043456
        %v219 = vsel %vm217, %v210, 0
        %221 = vmatprep.subr.mxu0 0.0
        %222 = vmatpush1.msra.mxu0 %v209
        %223 = vmatprep.subr.mxu0 0.0
        %224 = vmatpush1.msra.mxu0 %v219
        %225 = vmatprep.subr.mxu0 0.0
        %226 = vmatpush1.msra.mxu0 0.0
        %227 = vmatprep.subr.mxu0 0.0
        %228 = vmatpush1.msra.mxu0 0.0
        %229 = vmatprep.subr.mxu0 0.0
        %230 = vmatpush1.msra.mxu0 0.0
        %231 = vmatprep.subr.mxu0 0.0
        %232 = vmatpush1.msra.mxu0 0.0
        %233 = vmatprep.subr.mxu0 0.0
        %234 = vmatpush1.msra.mxu0 0.0
        %235 = vmatprep.subr.mxu0 0.0
        %236 = vmatpush1.msra.mxu0 0.0
        %237 = vmatprep.subr.mxu0 0.0
        %238 = vmatpush1.msra.mxu0 0.0
        %239 = vmatprep.subr.mxu0 0.0
        %240 = vmatpush1.msra.mxu0 0.0
        %241 = vmatprep.subr.mxu0 0.0
        %242 = vmatpush1.msra.mxu0 0.0
        %243 = vmatprep.subr.mxu0 0.0
        %244 = vmatpush1.msra.mxu0 0.0
        %245 = vmatprep.subr.mxu0 0.0
        %246 = vmatpush1.msra.mxu0 0.0
        %247 = vmatprep.subr.mxu0 0.0
        %248 = vmatpush1.msra.mxu0 0.0
        %249 = vmatprep.subr.mxu0 0.0
        %250 = vmatpush1.msra.mxu0 0.0
        %251 = vmatprep.subr.mxu0 0.0
        %252 = vmatpush1.msra.mxu0 0.0
        %253 = vmatprep.subr.mxu0 0.0
        %254 = vmatpush1.msra.mxu0 0.0
        %255 = vmatprep.subr.mxu0 0.0
        %256 = vmatpush1.msra.mxu0 0.0
        %257 = vmatprep.subr.mxu0 0.0
        %258 = vmatpush1.msra.mxu0 0.0
        %259 = vmatprep.subr.mxu0 0.0
        %260 = vmatpush1.msra.mxu0 0.0
        %261 = vmatprep.subr.mxu0 0.0
        %262 = vmatpush1.msra.mxu0 0.0
        %263 = vmatprep.subr.mxu0 0.0
        %264 = vmatpush1.msra.mxu0 0.0
        %265 = vmatprep.subr.mxu0 0.0
        %266 = vmatpush1.msra.mxu0 0.0
        %267 = vmatprep.subr.mxu0 0.0
        %268 = vmatpush1.msra.mxu0 0.0
        %269 = vmatprep.subr.mxu0 0.0
        %270 = vmatpush1.msra.mxu0 0.0
        %271 = vmatprep.subr.mxu0 0.0
        %272 = vmatpush1.msra.mxu0 0.0
        %273 = vmatprep.subr.mxu0 0.0
        %274 = vmatpush1.msra.mxu0 0.0
        %275 = vmatprep.subr.mxu0 0.0
        %276 = vmatpush1.msra.mxu0 0.0
        %277 = vmatprep.subr.mxu0 0.0
        %278 = vmatpush1.msra.mxu0 0.0
        %279 = vmatprep.subr.mxu0 0.0
        %280 = vmatpush1.msra.mxu0 0.0
        %281 = vmatprep.subr.mxu0 0.0
        %282 = vmatpush1.msra.mxu0 0.0
        %283 = vmatprep.subr.mxu0 0.0
        %284 = vmatpush1.msra.mxu0 0.0
        %285 = vmatprep.mubr.f32.mxu0 0.0
        %286 = vmatmul.mubr.f32.gmra.mrb[0].mxu0 %v215
        %v287 = vpop.f32.mrb[0].mxu0
        %v288 = vadd.f32 %v212, %v287
        %v289 = vpop.f32.mrb[0].mxu0
        %290 = vdwg.mxu0
        %vm291 = vcmask 261120
        %292 = vst.msk [vmem:[%s196] sm:$0xff] %vm291, %v288
        %s293 = sand.u32 %s114, 1
        %s294 = scalar_lea.sflag [#allocation3], %s293
        %s295 = sand.u32 %s114, 1
        %s296 = smul.addr %s295, 8
        %s297 = scalar_lea.vmem [#allocation2], %s296
        // Predicated region
        $region33: #{data_embedding.1} parent=31 // pred_check
          %p298 = pneg %p124
        $region34: #{data_embedding.1} parent=31 // pred_check_branch
          %300 = sbr.rel (%p298) target = $region36
        $region35: #{data_embedding.1} parent=31 // pred_region
          %s302 = ssub.s32 128, 128
          %303 = vsyncadd %s294, %s302
          %s304 = sadd.s32 %s21, %s22
          %s305 = smul.addr %s304, 128
          %s306 = scalar_lea.hbm %s3, %s305
          %s308 = sshll.u32 %s297, 4
          %s309 = int_to_ptr.vmem [resolvable:$true] %s308
          %311 = dma.vmem_to_hbm [thread:$0]  %s309, 128, %s306, %s294
        $region36: #{data_embedding.1} parent=31 // pred_fallthru
          _
      $region32: #{data_embedding.1} parent=5 // pred_fallthru
        _
      %p312 = scmp.le.s32.totalorder 2, %s12
      // Predicated region
      $region37: #{data_embedding.1} parent=5 // pred_check
        %p313 = pneg %p312
      $region38: #{data_embedding.1} parent=5 // pred_check_branch
        %315 = sbr.rel (%p313) target = $region40
      $region39: #{data_embedding.1} parent=5 // pred_region
        %s316 = ssub.s32 %s12, 2
        // Predicated region
        $region41: #{data_embedding.1} parent=39 // pred_check
          %p317 = pneg %p130
        $region42: #{data_embedding.1} parent=39 // pred_check_branch
          %319 = sbr.rel (%p317) target = $region44
        $region43: #{data_embedding.1} parent=39 // pred_region
          %s320 = sand.u32 %s115, 1
          %s321 = scalar_lea.sflag [#allocation3], %s320
          %s322 = sand.u32 %s115, 1
          %s323 = smul.addr %s322, 8
          %s324 = scalar_lea.vmem [#allocation2], %s323
          %325 = dma.done %s321, 128
        $region44: #{data_embedding.1} parent=39 // pred_fallthru
          _
      $region40: #{data_embedding.1} parent=5 // pred_fallthru
        _
    $region6: #{data_embedding.1} parent=1 // loop_footer
      %s16 = sadd.s32 1, %s12
    $region7: #{data_embedding.1} parent=1 // loop_footer_branch
      %11 = sbr.rel target = $region3
    $region8: #{data_embedding.1} parent=1 // loop_exit
      _
    %326 = vsyncpa [#allocation3], 1
    %s327 = scalar_lea.sflag [#allocation3], 1
    %328 = vsyncpa %s327, 1

</llo_original>
